<compile_context>
chip_gen: v6e
topology: v6e:2x2x1
jax: 0.10.0
libtpu: 0.0.40
codegen_flags: <defaults>
</compile_context>

<pallas_src>
import jax
import jax.numpy as jnp
from jax.experimental import pallas as pl
from jax.experimental.pallas import tpu as pltpu


# Candidate lane-dense widths for the 2D view (widest first).
_WIDTH_CANDIDATES = (1024, 512, 256, 128)

# Byte target per block: ~2 MiB hits ~85% of HBM roofline in measured tile
# sweeps and keeps (in + out) x 2 pipeline buffers = 8 MiB of VMEM, safe on
# every generation's scoped-VMEM default (16 MiB on v5e).
_TARGET_BLOCK_BYTES = 2 * 1024 * 1024

# Row-count multiple compatible with sublane packing of f32 (8), bf16 (16)
# and int8/fp8 (32).
_SUBLANE_MULT = 32


def _swish_kernel(beta_ref, x_ref, o_ref):
    # beta_ref: (1,) f32 scalar in SMEM; x_ref/o_ref: (block_rows, width) VMEM.
    beta = beta_ref[0]
    xv = x_ref[...].astype(jnp.float32)                    # compute in f32
    o_ref[...] = (xv * jax.nn.sigmoid(beta * xv)).astype(o_ref.dtype)


def _swish_jnp(x, beta_f32):
    """Plain-JAX fallback for tiny / ragged tails (same f32 math as kernel)."""
    xv = x.astype(jnp.float32)
    return (xv * jax.nn.sigmoid(beta_f32 * xv)).astype(x.dtype)


def _block_rows_for(rows, width, itemsize):
    """Byte-targeted block sizing; guarantees >=2 grid steps when possible."""
    if rows <= _SUBLANE_MULT:
        return rows  # full-extent block along rows is always legal
    br = (_TARGET_BLOCK_BYTES // (width * itemsize)) // _SUBLANE_MULT * _SUBLANE_MULT
    br = max(br, _SUBLANE_MULT)
    if br >= rows:
        # Whole array fits in one block: split into >=2 row blocks so the
        # "parallel" grid axis can shard across v7x's two TensorCores.
        half = -(-rows // 2)                                   # ceil(rows / 2)
        half = -(-half // _SUBLANE_MULT) * _SUBLANE_MULT       # round up
        br = half if half < rows else rows
    return br


def _swish_pallas_2d(x2d, beta_arr):
    rows, width = x2d.shape
    itemsize = jnp.dtype(x2d.dtype).itemsize
    block_rows = _block_rows_for(rows, width, itemsize)
    grid = (pl.cdiv(rows, block_rows),)

    return pl.pallas_call(
        _swish_kernel,
        out_shape=jax.ShapeDtypeStruct((rows, width), x2d.dtype),
        grid=grid,
        in_specs=[
            pl.BlockSpec(memory_space=pltpu.MemorySpace.SMEM),    # beta scalar
            pl.BlockSpec((block_rows, width), lambda i: (i, 0)),  # x tile
        ],
        out_specs=pl.BlockSpec((block_rows, width), lambda i: (i, 0)),
        compiler_params=pltpu.CompilerParams(
            dimension_semantics=("parallel",),
        ),
    )(beta_arr, x2d)


def swish_pallas(x, beta=1.0):
    """Elementwise Swish (x * sigmoid(beta * x)) via a Pallas TPU kernel."""
    orig_shape = x.shape
    flat = x.reshape(-1)
    n = flat.shape[0]

    beta_f32 = jnp.asarray(beta, dtype=jnp.float32)

    if n == 0:
        return x
    if n < 128:
        # Too small for a lane-dense kernel block; one vreg of plain jnp.
        return _swish_jnp(flat, beta_f32).reshape(orig_shape)

    beta_arr = beta_f32.reshape(1)

    if n % 128 == 0:
        # Common case: free reshape to the widest lane-dense width dividing n.
        width = 128
        for w in _WIDTH_CANDIDATES:
            if n % w == 0:
                width = w
                break
        x2d = flat.reshape(n // width, width)
        out2d = _swish_pallas_2d(x2d, beta_arr)
        return out2d.reshape(orig_shape)

    # Rare ragged case: kernel on the 128-aligned prefix, plain jnp on the
    # <128-element tail (no whole-array pad / slice round trips).
    n_main = (n // 128) * 128
    width = 128
    for w in _WIDTH_CANDIDATES:
        if n_main % w == 0:
            width = w
            break
    main2d = flat[:n_main].reshape(n_main // width, width)
    out_main = _swish_pallas_2d(main2d, beta_arr).reshape(-1)
    out_tail = _swish_jnp(flat[n_main:], beta_f32)
    return jnp.concatenate([out_main, out_tail]).reshape(orig_shape)


class SwishPallas:
    """Mirror of the PyTorch Swish module.

    trainable_beta only changes whether beta is a learnable parameter in
    PyTorch; the forward semantics are identical, so here beta is a scalar.
    """

    def __init__(self, trainable_beta=False, initial_beta=1.0):
        self.beta = jnp.asarray(initial_beta, dtype=jnp.float32)

    def __call__(self, x):
        return swish_pallas(x, beta=self.beta)


if __name__ == "__main__":
    key = jax.random.PRNGKey(0)

    # Small NCHW input consistent with the VAE conv stack this module is used in.
    x = jax.random.normal(key, (2, 4, 16, 16), dtype=jnp.float32)
    swish = SwishPallas(trainable_beta=False, initial_beta=1.0)
    y = jax.block_until_ready(swish(x))
    ref = x * jax.nn.sigmoid(1.0 * x)
    assert y.shape == x.shape and y.dtype == x.dtype
    assert jnp.max(jnp.abs(y - ref)) < 1e-6

    # Ragged-length input exercises the aligned-prefix + jnp-tail path.
    xr = jax.random.normal(jax.random.PRNGKey(1), (3, 7, 11), dtype=jnp.float32)
    yr = jax.block_until_ready(swish_pallas(xr, beta=0.75))
    refr = xr * jax.nn.sigmoid(0.75 * xr)
    assert yr.shape == xr.shape and yr.dtype == xr.dtype
    assert jnp.max(jnp.abs(yr - refr)) < 1e-6

    print("KERNEL_OK")
</pallas_src>

<mosaic_0001>
module attributes {stable_mosaic.version = 11 : i64} {
  func.func @_swish_kernel(%arg0: i32, %arg1: memref<1xf32, #tpu.memory_space<smem>>, %arg2: memref<2x1024xf32, #tpu.memory_space<vmem>>, %arg3: memref<2x1024xf32, #tpu.memory_space<vmem>>) attributes {dimension_semantics = [#tpu.dimension_semantics<parallel>], iteration_bounds = array<i64: 1>, scalar_prefetch = 0 : i64, scratch_operands = 0 : i64, tpu.core_type = #tpu.core_type<tc>, window_params = [{transform_indices = @transform_0, window_bounds = array<i64: 1>}, {transform_indices = @transform_1, window_bounds = array<i64: 2, 1024>}, {transform_indices = @transform_2, window_bounds = array<i64: 2, 1024>}]} {
    %c0 = arith.constant 0 : index
    %0 = memref.load %arg1[%c0] : memref<1xf32, #tpu.memory_space<smem>>
    %c0_0 = arith.constant 0 : index
    %c0_1 = arith.constant 0 : index
    %1 = vector.load %arg2[%c0_0, %c0_1] : memref<2x1024xf32, #tpu.memory_space<vmem>>, vector<2x1024xf32>
    %2 = vector.broadcast %0 : f32 to vector<2x1024xf32>
    %3 = arith.mulf %2, %1 : vector<2x1024xf32>
    %4 = arith.negf %3 : vector<2x1024xf32>
    %5 = math.exp %4 : vector<2x1024xf32>
    %cst = arith.constant 1.000000e+00 : f32
    %6 = vector.broadcast %cst : f32 to vector<2x1024xf32>
    %7 = arith.addf %6, %5 : vector<2x1024xf32>
    %8 = arith.divf %6, %7 : vector<2x1024xf32>
    %9 = arith.mulf %1, %8 : vector<2x1024xf32>
    %c0_2 = arith.constant 0 : index
    %c0_3 = arith.constant 0 : index
    %10 = vector.load %arg3[%c0_2, %c0_3] : memref<2x1024xf32, #tpu.memory_space<vmem>>, vector<2x1024xf32>
    tpu.vector_store %arg3[%c0_2, %c0_3], %9 {strides = array<i32>} : memref<2x1024xf32, #tpu.memory_space<vmem>>, vector<2x1024xf32>,
    return
  }
  func.func @transform_0(%arg0: i32) -> i32 {
    %c0_i32 = arith.constant 0 : i32
    %c0_i32_0 = arith.constant 0 : i32
    return %c0_i32 : i32
  }
  func.func @transform_1(%arg0: i32) -> (i32, i32) {
    %c0_i32 = arith.constant 0 : i32
    %c0_i32_0 = arith.constant 0 : i32
    return %arg0, %c0_i32 : i32, i32
  }
  func.func @transform_2(%arg0: i32) -> (i32, i32) {
    %c0_i32 = arith.constant 0 : i32
    %c0_i32_0 = arith.constant 0 : i32
    return %arg0, %c0_i32 : i32, i32
  }
}

</mosaic_0001>

<llo_original>
// kernel: tpu_custom_call.1
$region0: #{tpu_custom_call.1}
  #allocation0 [shape = 'u32[]', space=smem, size = 0x4, offset = 0x4, fixed_abs, tag = 'smem constant byte address 0x4 - core index']
  #allocation1 [shape = 'u32[144,128]{1,0:T(1,128)}', space=vmem, size = 0x12000, scoped, tag = 'internal scratch']
  #allocation2 [shape = 'f32[1]{0:T(128)S(6)}', space=smem, size = 0x200, scoped, tag = 'scoped memory for tpu_custom_call.1']
  %s0 = inlined_call_operand.<no memory space> [shape: f32[1], index: 0, kind: input, shape index: {}]
  %s1 = inlined_call_operand.hbm [shape: f32[2,1024], index: 1, kind: input, shape index: {}]
  %s2 = inlined_call_operand.hbm [shape: f32[2,1024], index: 2, kind: output, shape index: {}]
  %s3 = sld [smem:[#allocation0]]
  $region22: #{tpu_custom_call.1} parent=0
    _
  %s5 = ssub.s32 1, %s3
  %s6 = scalar_select 0, %s5, %s3
  %7 = sst [smem:[#allocation2]] %s0
  $region1: #{tpu_custom_call.1} parent=0
    #allocation3 [shape = 'u8[8192]{0}', space=vmem, size = 0x2000, scoped, tag = 'input window, operand 1, single buffered']
    #allocation4 [shape = 's32[1]{0}', space=sflag, size = 0x4, scoped, tag = 'scoped memory for tpu_custom_call.1']
    #allocation5 [shape = 's32[1]{0}', space=sflag, size = 0x4, scoped, tag = 'scoped memory for tpu_custom_call.1']
    #allocation6 [shape = 'u8[8192]{0}', space=vmem, size = 0x2000, scoped, tag = 'output window, operand 0, single buffered']
    %8 = vsyncpa [#allocation4], 0
    %9 = vsyncpa [#allocation5], 0
    // Predicated region
    $region2: #{tpu_custom_call.1} parent=1 // pred_check
      _
    $region3: #{tpu_custom_call.1} parent=1 // pred_check_branch
      %11 = sbr.rel (0) target = $region5
    $region4: #{tpu_custom_call.1} parent=1 // pred_region
      _
    $region5: #{tpu_custom_call.1} parent=1 // pred_fallthru
      _
    // Predicated region
    $region6: #{tpu_custom_call.1} parent=1 // pred_check
      _
    $region7: #{tpu_custom_call.1} parent=1 // pred_check_branch
      %13 = sbr.rel (0) target = $region9
    $region8: #{tpu_custom_call.1} parent=1 // pred_region
      %s15 = ssub.s32 256, 256
      %16 = vsyncadd [#allocation4], %s15
      %s18 = sshll.u32 [#allocation3], 4
      %s19 = int_to_ptr.vmem [resolvable:$true] %s18
      %21 = dma.hbm_to_vmem [thread:$0]  %s1, 256, %s19, [#allocation4]
    $region9: #{tpu_custom_call.1} parent=1 // pred_fallthru
      _
    // Predicated region
    $region10: #{tpu_custom_call.1} parent=1 // pred_check
      _
    $region11: #{tpu_custom_call.1} parent=1 // pred_check_branch
      %23 = sbr.rel (0) target = $region13
    $region12: #{tpu_custom_call.1} parent=1 // pred_region
      %24 = dma.done [#allocation4], 256
    $region13: #{tpu_custom_call.1} parent=1 // pred_fallthru
      _
    %s25 = sld [smem:[#allocation2]]
    %v26 = vld [vmem:[#allocation3] sm:$0xff]
    %v27 = vld [vmem:[#allocation3 + $0x8] sm:$0xff]
    %v28 = vstv %s25
    %v29 = vmul.f32 %v28, %v26
    %v30 = vmul.f32 %v28, %v27
    %v31 = vxor.u32 %v29, 2147483648
    %v32 = vxor.u32 %v30, 2147483648
    %v33 = vmul.f32 %v31, 1.442695
    %v34 = vpow.pop %v33
    %v35 = vmul.f32 %v32, 1.442695
    %v36 = vpow.pop %v35
    %v37 = vadd.f32 %v34, 1.0
    %v38 = vadd.f32 %v36, 1.0
    %v39 = vrcp.pop %v37
    %v40 = vmul.f32 1.0, %v39
    %v41 = vrcp.pop %v38
    %v42 = vmul.f32 1.0, %v41
    %v43 = vmul.f32 %v26, %v40
    %v44 = vmul.f32 %v27, %v42
    %45 = vst [vmem:[#allocation6] sm:$0xff] %v43
    %46 = vst [vmem:[#allocation6 + $0x8] sm:$0xff] %v44
    // Predicated region
    $region14: #{tpu_custom_call.1} parent=1 // pred_check
      _
    $region15: #{tpu_custom_call.1} parent=1 // pred_check_branch
      %48 = sbr.rel (0) target = $region17
    $region16: #{tpu_custom_call.1} parent=1 // pred_region
      %s50 = ssub.s32 256, 256
      %51 = vsyncadd [#allocation5], %s50
      %s53 = sshll.u32 [#allocation6], 4
      %s54 = int_to_ptr.vmem [resolvable:$true] %s53
      %56 = dma.vmem_to_hbm [thread:$0]  %s54, 256, %s2, [#allocation5]
    $region17: #{tpu_custom_call.1} parent=1 // pred_fallthru
      _
    // Predicated region
    $region18: #{tpu_custom_call.1} parent=1 // pred_check
      _
    $region19: #{tpu_custom_call.1} parent=1 // pred_check_branch
      %58 = sbr.rel (0) target = $region21
    $region20: #{tpu_custom_call.1} parent=1 // pred_region
      %59 = dma.done [#allocation5], 256
    $region21: #{tpu_custom_call.1} parent=1 // pred_fallthru
      _
    %60 = vsyncpa [#allocation4], 1
    %61 = vsyncpa [#allocation5], 1

</llo_original>
